<compile_context>
chip_gen: v5e
topology: v5e:2x2
jax: 0.10.0
libtpu: 0.0.40
codegen_flags: <defaults>
</compile_context>

<pallas_src>
import jax
import jax.numpy as jnp
from jax import lax
from jax.experimental import pallas as pl
from jax.experimental.pallas import tpu as pltpu


def _conv3x3_im2col_kernel(x_ref, w_ref, o_ref):
    # x_ref: (Hp, Wp, Cin)      -- full zero-padded image (VMEM-resident per batch)
    # w_ref: (9*Cin, Cout_pad)  -- 3x3 taps folded into K, lane-padded N
    # o_ref: (tile_h, W, Cout_pad)
    tile_h, W, cout_p = o_ref.shape
    cin = x_ref.shape[-1]
    ht = pl.program_id(1)
    row0 = pl.multiple_of(ht * tile_h, tile_h)

    # (tile_h + 2) halo'd rows of the padded image for this output tile.
    win = x_ref[pl.ds(row0, tile_h + 2), :, :]            # (tile_h+2, Wp, Cin)

    # im2col: 9 shifted views concatenated along K -> a single MXU push.
    taps = []
    for dy in range(3):
        for dx in range(3):
            taps.append(win[dy:dy + tile_h, dx:dx + W, :].reshape(tile_h * W, cin))
    patch = jnp.concatenate(taps, axis=-1)                # (tile_h*W, 9*Cin)

    acc = jnp.dot(patch, w_ref[...], preferred_element_type=jnp.float32)
    o_ref[...] = acc.reshape(tile_h, W, cout_p).astype(o_ref.dtype)


def _pick_tile_h(H, W, cout_p, itemsize, budget=2 * 1024 * 1024):
    """Largest divisor of H whose lane-dense output block stays <= ~2 MiB, while
    keeping >= 2 H-tiles (pipeline depth / megacore sharding) when H allows."""
    best = 1
    for th in range(1, H + 1):
        if H % th:
            continue
        if th * W * cout_p * itemsize > budget:
            continue
        if H > 8 and th > max(8, H // 2):
            continue
        best = th
    return best


def conv3x3_same_pallas(x_nhwc, weight_oihw):
    """3x3 'same' conv, stride 1, no bias.
    x_nhwc: (N,H,W,Cin); weight_oihw: (Cout,Cin,3,3) (PyTorch layout).
    Returns (N,H,W,Cout)."""
    N, H, W, Cin = x_nhwc.shape
    Cout = weight_oihw.shape[0]
    cout_p = ((Cout + 127) // 128) * 128          # lane-dense output channels

    # (Cout,Cin,3,3) -> (3,3,Cin,Cout) -> (9*Cin, Cout), zero-pad N to cout_p.
    w = jnp.transpose(weight_oihw, (2, 3, 1, 0)).reshape(9 * Cin, Cout)
    if cout_p != Cout:
        w = jnp.pad(w, ((0, 0), (0, cout_p - Cout)))

    # TODO(synk): fold the 'same' padding and the PixelShuffle scatter into the
    # kernel's index maps to remove the remaining wrapper-side HBM passes.
    x_pad = jnp.pad(x_nhwc, ((0, 0), (1, 1), (1, 1), (0, 0)))
    Hp, Wp = H + 2, W + 2

    itemsize = jnp.dtype(x_nhwc.dtype).itemsize
    tile_h = _pick_tile_h(H, W, cout_p, itemsize)
    n_ht = H // tile_h

    y = pl.pallas_call(
        _conv3x3_im2col_kernel,
        out_shape=jax.ShapeDtypeStruct((N, H, W, cout_p), x_nhwc.dtype),
        grid_spec=pltpu.PrefetchScalarGridSpec(
            num_scalar_prefetch=0,
            grid=(N, n_ht),
            in_specs=[
                # Full padded image per batch element; block index is constant
                # across ht, so it is DMA'd once per batch and stays resident.
                pl.BlockSpec((pl.Squeezed(), Hp, Wp, Cin),
                             lambda b, ht: (b, 0, 0, 0)),
                # Folded weights, fetched once.
                pl.BlockSpec((9 * Cin, cout_p), lambda b, ht: (0, 0)),
            ],
            out_specs=pl.BlockSpec((pl.Squeezed(), tile_h, W, cout_p),
                                   lambda b, ht: (b, ht, 0, 0)),
        ),
        compiler_params=pltpu.CompilerParams(
            dimension_semantics=("parallel", "parallel"),
            vmem_limit_bytes=48 * 1024 * 1024),
    )(x_pad, w)

    return y[..., :Cout]


def pixel_shuffle_from_nhwc(y_nhwc, r):
    """PixelShuffle(r) applied directly to an NHWC conv output; returns NCHW."""
    N, H, W, Cr2 = y_nhwc.shape
    C = Cr2 // (r * r)
    y = y_nhwc.reshape(N, H, W, C, r, r)
    y = jnp.transpose(y, (0, 3, 1, 4, 2, 5))      # N, C, H, r, W, r
    return y.reshape(N, C, H * r, W * r)


def pixel_shuffle_nchw(x_nchw, r):
    """Reference PyTorch nn.PixelShuffle on NCHW input (used for the self-test)."""
    N, Cr2, H, W = x_nchw.shape
    C = Cr2 // (r * r)
    x = x_nchw.reshape(N, C, r, r, H, W)
    x = jnp.transpose(x, (0, 1, 4, 2, 5, 3))
    return x.reshape(N, C, H * r, W * r)


def upsample_forward(x_nchw, weight_oihw, scale):
    """Equivalent of Upsample(dim, scale).forward(x) for NCHW input."""
    x_nhwc = jnp.transpose(x_nchw, (0, 2, 3, 1))
    y_nhwc = conv3x3_same_pallas(x_nhwc, weight_oihw)
    return pixel_shuffle_from_nhwc(y_nhwc, scale)


if __name__ == "__main__":
    # Small shapes consistent with the module: dim=4, scale=2, 16x16 spatial.
    N, dim, H, W = 2, 4, 16, 16
    scale = 2
    Cout = dim * scale ** 2

    key = jax.random.PRNGKey(0)
    kx, kw = jax.random.split(key)
    x = jax.random.normal(kx, (N, dim, H, W), dtype=jnp.float32)
    # Conv2d weight shape in PyTorch: (out_channels, in_channels, kH, kW)
    weight = jax.random.normal(kw, (Cout, dim, 3, 3), dtype=jnp.float32) * 0.1

    out = jax.block_until_ready(upsample_forward(x, weight, scale))

    # Cross-check against a pure-JAX reference (conv + pixel shuffle).
    ref_conv = lax.conv_general_dilated(
        x, weight, window_strides=(1, 1), padding="SAME",
        dimension_numbers=("NCHW", "OIHW", "NCHW"))
    ref = pixel_shuffle_nchw(ref_conv, scale)
    assert out.shape == (N, dim, H * scale, W * scale)
    assert jnp.allclose(out, ref, atol=1e-4, rtol=1e-4)

    print("KERNEL_OK")
</pallas_src>

<mosaic_0001>
module attributes {stable_mosaic.version = 11 : i64} {
  func.func @_conv3x3_im2col_kernel(%arg0: i32, %arg1: i32, %arg2: memref<1x18x18x4xf32, #tpu.memory_space<vmem>>, %arg3: memref<36x128xf32, #tpu.memory_space<vmem>>, %arg4: memref<1x8x16x128xf32, #tpu.memory_space<vmem>>) attributes {dimension_semantics = [#tpu.dimension_semantics<parallel>, #tpu.dimension_semantics<parallel>], iteration_bounds = array<i64: 2, 2>, scalar_prefetch = 0 : i64, scratch_operands = 0 : i64, tpu.core_type = #tpu.core_type<tc>, window_params = [{transform_indices = @transform_0, window_bounds = array<i64: 1, 18, 18, 4>}, {pipeline_mode = #tpu.pipeline_mode<synchronous>, transform_indices = @transform_1, window_bounds = array<i64: 36, 128>}, {transform_indices = @transform_2, window_bounds = array<i64: 1, 8, 16, 128>}]} {
    %c8_i32 = arith.constant 8 : i32
    %0 = arith.muli %arg1, %c8_i32 : i32
    %1 = tpu.assume_multiple %0, 8 : i32
    %c0 = arith.constant 0 : index
    %2 = arith.index_cast %1 : i32 to index
    %c0_0 = arith.constant 0 : index
    %c0_1 = arith.constant 0 : index
    %3 = vector.load %arg2[%c0, %2, %c0_0, %c0_1] : memref<1x18x18x4xf32, #tpu.memory_space<vmem>>, vector<1x10x18x4xf32>
    %4 = vector.shape_cast %3 : vector<1x10x18x4xf32> to vector<10x18x4xf32>
    %5 = vector.extract_strided_slice %4 {offsets = [0, 0, 0], sizes = [8, 16, 4], strides = [1, 1, 1]} : vector<10x18x4xf32> to vector<8x16x4xf32>
    %6 = vector.shape_cast %5 : vector<8x16x4xf32> to vector<128x4xf32>
    %7 = vector.extract_strided_slice %4 {offsets = [0, 1, 0], sizes = [8, 16, 4], strides = [1, 1, 1]} : vector<10x18x4xf32> to vector<8x16x4xf32>
    %8 = vector.shape_cast %7 : vector<8x16x4xf32> to vector<128x4xf32>
    %9 = vector.extract_strided_slice %4 {offsets = [0, 2, 0], sizes = [8, 16, 4], strides = [1, 1, 1]} : vector<10x18x4xf32> to vector<8x16x4xf32>
    %10 = vector.shape_cast %9 : vector<8x16x4xf32> to vector<128x4xf32>
    %11 = vector.extract_strided_slice %4 {offsets = [1, 0, 0], sizes = [8, 16, 4], strides = [1, 1, 1]} : vector<10x18x4xf32> to vector<8x16x4xf32>
    %12 = vector.shape_cast %11 : vector<8x16x4xf32> to vector<128x4xf32>
    %13 = vector.extract_strided_slice %4 {offsets = [1, 1, 0], sizes = [8, 16, 4], strides = [1, 1, 1]} : vector<10x18x4xf32> to vector<8x16x4xf32>
    %14 = vector.shape_cast %13 : vector<8x16x4xf32> to vector<128x4xf32>
    %15 = vector.extract_strided_slice %4 {offsets = [1, 2, 0], sizes = [8, 16, 4], strides = [1, 1, 1]} : vector<10x18x4xf32> to vector<8x16x4xf32>
    %16 = vector.shape_cast %15 : vector<8x16x4xf32> to vector<128x4xf32>
    %17 = vector.extract_strided_slice %4 {offsets = [2, 0, 0], sizes = [8, 16, 4], strides = [1, 1, 1]} : vector<10x18x4xf32> to vector<8x16x4xf32>
    %18 = vector.shape_cast %17 : vector<8x16x4xf32> to vector<128x4xf32>
    %19 = vector.extract_strided_slice %4 {offsets = [2, 1, 0], sizes = [8, 16, 4], strides = [1, 1, 1]} : vector<10x18x4xf32> to vector<8x16x4xf32>
    %20 = vector.shape_cast %19 : vector<8x16x4xf32> to vector<128x4xf32>
    %21 = vector.extract_strided_slice %4 {offsets = [2, 2, 0], sizes = [8, 16, 4], strides = [1, 1, 1]} : vector<10x18x4xf32> to vector<8x16x4xf32>
    %22 = vector.shape_cast %21 : vector<8x16x4xf32> to vector<128x4xf32>
    %23 = tpu.concatenate %6, %8, %10, %12, %14, %16, %18, %20, %22 in 1 : vector<128x4xf32>, vector<128x4xf32>, vector<128x4xf32>, vector<128x4xf32>, vector<128x4xf32>, vector<128x4xf32>, vector<128x4xf32>, vector<128x4xf32>, vector<128x4xf32> -> vector<128x36xf32>
    %c0_2 = arith.constant 0 : index
    %c0_3 = arith.constant 0 : index
    %24 = vector.load %arg3[%c0_2, %c0_3] : memref<36x128xf32, #tpu.memory_space<vmem>>, vector<36x128xf32>
    %cst = arith.constant dense<0.000000e+00> : vector<128x128xf32>
    %25 = tpu.matmul %23, %24, %cst {dimension_numbers = #tpu.dot_dimension_numbers<[1], [0], [0], [1], [0, 0, 1, 1], [], []>} : vector<128x36xf32>, vector<36x128xf32>, vector<128x128xf32> -> vector<128x128xf32>
    %26 = vector.shape_cast %25 : vector<128x128xf32> to vector<8x16x128xf32>
    %c0_4 = arith.constant 0 : index
    %c0_5 = arith.constant 0 : index
    %c0_6 = arith.constant 0 : index
    %c0_7 = arith.constant 0 : index
    %27 = vector.load %arg4[%c0_4, %c0_5, %c0_6, %c0_7] : memref<1x8x16x128xf32, #tpu.memory_space<vmem>>, vector<1x8x16x128xf32>
    %28 = vector.shape_cast %27 : vector<1x8x16x128xf32> to vector<8x16x128xf32>
    %29 = vector.shape_cast %26 : vector<8x16x128xf32> to vector<1x8x16x128xf32>
    tpu.vector_store %arg4[%c0_4, %c0_5, %c0_6, %c0_7], %29 {strides = array<i32>} : memref<1x8x16x128xf32, #tpu.memory_space<vmem>>, vector<1x8x16x128xf32>,
    return
  }
  func.func @transform_0(%arg0: i32, %arg1: i32) -> (i32, i32, i32, i32) {
    %c0_i32 = arith.constant 0 : i32
    %c0_i32_0 = arith.constant 0 : i32
    %c0_i32_1 = arith.constant 0 : i32
    %c0_i32_2 = arith.constant 0 : i32
    return %arg0, %c0_i32, %c0_i32_0, %c0_i32_1 : i32, i32, i32, i32
  }
  func.func @transform_1(%arg0: i32, %arg1: i32) -> (i32, i32) {
    %c0_i32 = arith.constant 0 : i32
    %c0_i32_0 = arith.constant 0 : i32
    %c0_i32_1 = arith.constant 0 : i32
    return %c0_i32, %c0_i32_0 : i32, i32
  }
  func.func @transform_2(%arg0: i32, %arg1: i32) -> (i32, i32, i32, i32) {
    %c0_i32 = arith.constant 0 : i32
    %c0_i32_0 = arith.constant 0 : i32
    %c0_i32_1 = arith.constant 0 : i32
    return %arg0, %arg1, %c0_i32, %c0_i32_0 : i32, i32, i32, i32
  }
}

</mosaic_0001>

<llo_original>
// kernel: tpu_custom_call.1
$region0: #{tpu_custom_call.1}
  #allocation0 [shape = 'u32[]', space=smem, size = 0x4, offset = 0x4, fixed_abs, tag = 'smem constant byte address 0x4 - core index']
  #allocation1 [shape = 'u32[72,128]{1,0:T(1,128)}', space=vmem, size = 0x9000, scoped, tag = 'internal scratch']
  %s0 = inlined_call_operand.vmem [shape: f32[2,18,18,4], index: 0, kind: input, shape index: {}]
  %s1 = inlined_call_operand.vmem [shape: f32[36,128], index: 1, kind: input, shape index: {}]
  %s2 = inlined_call_operand.hbm [shape: f32[2,16,16,128], index: 2, kind: output, shape index: {}]
  %s3 = sld [smem:[#allocation0]]
  $region41: #{tpu_custom_call.1} parent=0
    _
  %s5 = ssub.s32 1, %s3
  %s6 = scalar_select 0, %s5, %s3
  $region1: #{tpu_custom_call.1} parent=0
    #allocation2 [shape = 'u8[131072]{0}', space=vmem, size = 0x20000, scoped, tag = 'output window, operand 0']
    #allocation3 [shape = 's32[2]{0}', space=sflag, size = 0x8, scoped, tag = 'scoped memory for tpu_custom_call.1']
    %7 = vsyncpa [#allocation3], 0
    %s8 = scalar_lea.sflag [#allocation3], 1
    %9 = vsyncpa %s8, 0
    loop: start=0, step=1, limit=6
    $region2: #{tpu_custom_call.1} parent=1 // loop_pre_header
      _
    $region3: #{tpu_custom_call.1} parent=1 // loop_header
      %s11 = sphi 0, %s15
      %p12 = scmp.ge.s32.totalorder %s11, 6
      %s18 = sphi 0, %s30
      %s19 = sphi 0, %s26
      %s20 = sphi 0, %s18
      %s21 = sphi 0, %s19
      %s22 = sphi 0, %s20
      %s23 = sphi 0, %s21
      %s33 = sphi 0, %s35
      %s36 = sphi 0, %s33
      %s37 = sphi 0, %s36
      %s53 = sphi 0, %s37
      %s57 = sphi 0, %s57
      %s59 = sphi 0, %s57
      %s60 = sphi 0, %s59
      %s74 = sphi 0, %s60
      %s82 = sphi 0, %s84
      %s85 = sphi 0, %s82
      %s86 = sphi 0, %s85
      %s102 = sphi 0, %s86
    $region4: #{tpu_custom_call.1} parent=1 // loop_header_branch
      %14 = sbr.rel (%p12) target = $region8
    $region5: #{tpu_custom_call.1} parent=1 // loop_body
      %s16 = ssub.s32 %s11, 1
      %s17 = ssub.s32 %s11, 2
      %s24 = sadd.s32 1, %s19
      %p25 = scmp.ge.s32.totalorder %s24, 2
      %s26 = scalar_select %p25, 0, %s24
      %s27 = sadd.s32 1, %s18
      %s28 = scalar_select %p25, %s27, %s18
      %p29 = scmp.ge.s32.totalorder %s28, 2
      %s30 = scalar_select %p29, 0, %s28
      %s31 = ssub.s32 %s18, %s30
      %p32 = scmp.eq.s32.totalorder %s31, 0
      %s34 = sadd.s32 %s33, 1
      %s35 = scalar_select %p32, %s33, %s34
      %p38 = pneg %p32
      %p39 = scmp.eq.s32.totalorder %s11, 3
      %p40 = por %p38, %p39
      %p41 = scmp.ne.s32.totalorder %s33, %s36
      %p42 = scmp.eq.s32.totalorder %s11, 0
      %p43 = por %p41, %p42
      %p44 = scmp.ne.s32.totalorder %s33, %s36
      %p45 = scmp.eq.s32.totalorder %s16, 3
      %p46 = por %p44, %p45
      %p47 = scmp.ne.s32.totalorder %s36, %s37
      %p48 = scmp.eq.s32.totalorder %s16, 0
      %p49 = por %p47, %p48
      %p50 = scmp.ne.s32.totalorder %s36, %s37
      %p51 = scmp.eq.s32.totalorder %s17, 3
      %p52 = por %p50, %p51
      %p54 = scmp.ne.s32.totalorder %s37, %s53
      %p55 = scmp.eq.s32.totalorder %s17, 0
      %p56 = por %p54, %p55
      %s58 = sadd.s32 %s57, 1
      %p61 = scmp.eq.s32.totalorder %s11, 3
      %p62 = scmp.ne.s32.totalorder %s57, %s59
      %p63 = scmp.eq.s32.totalorder %s11, 0
      %p64 = por %p62, %p63
      %p65 = scmp.ne.s32.totalorder %s57, %s59
      %p66 = scmp.eq.s32.totalorder %s16, 3
      %p67 = por %p65, %p66
      %p68 = scmp.ne.s32.totalorder %s59, %s60
      %p69 = scmp.eq.s32.totalorder %s16, 0
      %p70 = por %p68, %p69
      %p71 = scmp.ne.s32.totalorder %s59, %s60
      %p72 = scmp.eq.s32.totalorder %s17, 3
      %p73 = por %p71, %p72
      %p75 = scmp.ne.s32.totalorder %s60, %s74
      %p76 = scmp.eq.s32.totalorder %s17, 0
      %p77 = por %p75, %p76
      %s78 = ssub.s32 %s18, %s30
      %s79 = ssub.s32 %s19, %s26
      %s80 = sor.u32 %s78, %s79
      %p81 = scmp.eq.s32.totalorder %s80, 0
      %s83 = sadd.s32 %s82, 1
      %s84 = scalar_select %p81, %s82, %s83
      %p87 = pneg %p81
      %p88 = scmp.eq.s32.totalorder %s11, 3
      %p89 = por %p87, %p88
      %p90 = scmp.ne.s32.totalorder %s82, %s85
      %p91 = scmp.eq.s32.totalorder %s11, 0
      %p92 = por %p90, %p91
      %p93 = scmp.ne.s32.totalorder %s82, %s85
      %p94 = scmp.eq.s32.totalorder %s16, 3
      %p95 = por %p93, %p94
      %p96 = scmp.ne.s32.totalorder %s85, %s86
      %p97 = scmp.eq.s32.totalorder %s16, 0
      %p98 = por %p96, %p97
      %p99 = scmp.ne.s32.totalorder %s85, %s86
      %p100 = scmp.eq.s32.totalorder %s17, 3
      %p101 = por %p99, %p100
      %p103 = scmp.ne.s32.totalorder %s86, %s102
      %p104 = scmp.eq.s32.totalorder %s17, 0
      %p105 = por %p103, %p104
      %p106 = scmp.le.s32.totalorder 1, %s11
      %p107 = scmp.lt.s32.totalorder %s11, 5
      %p108 = pnand %p106, %p107
      %p109 = pneg %p108
      // Predicated region
      $region9: #{tpu_custom_call.1} parent=5 // pred_check
        _
      $region10: #{tpu_custom_call.1} parent=5 // pred_check_branch
        %111 = sbr.rel (%p108) target = $region12
      $region11: #{tpu_custom_call.1} parent=5 // pred_region
        %s112 = ssub.s32 %s11, 1
        // Predicated region
        $region13: #{tpu_custom_call.1} parent=11 // pred_check
          %p113 = pneg %p70
        $region14: #{tpu_custom_call.1} parent=11 // pred_check_branch
          %115 = sbr.rel (%p113) target = $region16
        $region15: #{tpu_custom_call.1} parent=11 // pred_region
          _
        $region16: #{tpu_custom_call.1} parent=11 // pred_fallthru
          _
      $region12: #{tpu_custom_call.1} parent=5 // pred_fallthru
        _
      %p116 = scmp.lt.s32.totalorder %s11, 4
      // Predicated region
      $region17: #{tpu_custom_call.1} parent=5 // pred_check
        %p117 = pneg %p116
      $region18: #{tpu_custom_call.1} parent=5 // pred_check_branch
        %119 = sbr.rel (%p117) target = $region20
      $region19: #{tpu_custom_call.1} parent=5 // pred_region
        // Predicated region
        $region21: #{tpu_custom_call.1} parent=19 // pred_check
          %p120 = pneg %p43
        $region22: #{tpu_custom_call.1} parent=19 // pred_check_branch
          %122 = sbr.rel (%p120) target = $region24
        $region23: #{tpu_custom_call.1} parent=19 // pred_region
          %p123 = scmp.lt.s32.totalorder %s18, 1
          %s124 = scalar_select %p123, %s18, 1
          %s125 = smul.addr %s124, 54
          %s126 = smul.addr %s125, 8
          %s127 = scalar_lea.vmem %s0, %s126
        $region24: #{tpu_custom_call.1} parent=19 // pred_fallthru
          _
      $region20: #{tpu_custom_call.1} parent=5 // pred_fallthru
        _
      %p128 = scmp.le.s32.totalorder 1, %s11
      %p129 = scmp.lt.s32.totalorder %s11, 5
      %p130 = pnand %p128, %p129
      %p131 = pneg %p130
      // Predicated region
      $region25: #{tpu_custom_call.1} parent=5 // pred_check
        _
      $region26: #{tpu_custom_call.1} parent=5 // pred_check_branch
        %133 = sbr.rel (%p130) target = $region28
      $region27: #{tpu_custom_call.1} parent=5 // pred_region
        %s134 = ssub.s32 %s11, 1
        %p135 = scmp.lt.s32.totalorder %s20, 1
        %s136 = scalar_select %p135, %s20, 1
        %s137 = smul.addr %s136, 54
        %s138 = smul.addr %s137, 8
        %s139 = scalar_lea.vmem %s0, %s138
        %p140 = pneg %p49
        %p141 = pneg %p46
        %p142 = pneg %p70
        %p143 = pneg %p67
        %p144 = pneg %p98
        %p145 = pneg %p95
        %s146 = sand.u32 %s85, 1
        %s147 = scalar_lea.sflag [#allocation3], %s146
        %s148 = sand.u32 %s85, 1
        %s149 = smul.addr %s148, 128
        %s150 = scalar_lea.vmem [#allocation2], %s149
        %p151 = scmp.lt.s32.totalorder %s20, 1
        %s152 = scalar_select %p151, %s20, 1
        %s153 = smul.addr %s152, 54
        %s154 = smul.addr %s153, 8
        %s155 = scalar_lea.vmem %s0, %s154
        %s156 = smul.u32 8, %s21
        %s157 = smul.u32 %s21, 8
        %s158 = smul.u32 %s157, 24
        %s159 = scalar_lea.vmem %s155, %s158
        %v160 = vld [vmem:[%s159] sm:$0xff]
        %v161 = vld [vmem:[%s159 + $0x8] sm:$0xff]
        %v162 = vld [vmem:[%s159 + $0x10] sm:$0x3]
        %v163 = vld [vmem:[%s159 + $0x18] sm:$0xff]
        %v164 = vld [vmem:[%s159 + $0x20] sm:$0xff]
        %v165 = vld [vmem:[%s159 + $0x28] sm:$0x3]
        %v166 = vld [vmem:[%s159 + $0x30] sm:$0xff]
        %v167 = vld [vmem:[%s159 + $0x38] sm:$0xff]
        %v168 = vld [vmem:[%s159 + $0x40] sm:$0x3]
        %v169 = vld [vmem:[%s159 + $0x48] sm:$0xff]
        %v170 = vld [vmem:[%s159 + $0x50] sm:$0xff]
        %v171 = vld [vmem:[%s159 + $0x58] sm:$0x3]
        %v172 = vld [vmem:[%s159 + $0x60] sm:$0xff]
        %v173 = vld [vmem:[%s159 + $0x68] sm:$0xff]
        %v174 = vld [vmem:[%s159 + $0x70] sm:$0x3]
        %v175 = vld [vmem:[%s159 + $0x78] sm:$0xff]
        %v176 = vld [vmem:[%s159 + $0x80] sm:$0xff]
        %v177 = vld [vmem:[%s159 + $0x88] sm:$0x3]
        %v178 = vld [vmem:[%s159 + $0x90] sm:$0xff]
        %v179 = vld [vmem:[%s159 + $0x98] sm:$0xff]
        %v180 = vld [vmem:[%s159 + $0xa0] sm:$0x3]
        %v181 = vld [vmem:[%s159 + $0xa8] sm:$0xff]
        %v182 = vld [vmem:[%s159 + $0xb0] sm:$0xff]
        %v183 = vld [vmem:[%s159 + $0xb8] sm:$0x3]
        %v184 = vld [vmem:[%s159 + $0xc0] sm:$0xff]
        %v185 = vld [vmem:[%s159 + $0xc8] sm:$0xff]
        %v186 = vld [vmem:[%s159 + $0xd0] sm:$0x3]
        %v187 = vld [vmem:[%s159 + $0xd8] sm:$0xff]
        %v188 = vld [vmem:[%s159 + $0xe0] sm:$0xff]
        %v189 = vld [vmem:[%s159 + $0xe8] sm:$0x3]
        %vm214 = vcmask 1046528
        %v215 = vrot.slane %v160, 1
        %v216 = vrot.slane %v161, 1
        %v217 = vsel %vm214, %v215, %v216
        %v218 = vrot.slane %v162, 1
        %v219 = vsel %vm214, %v216, %v218
        %v220 = vrot.slane %v163, 1
        %v221 = vrot.slane %v164, 1
        %v222 = vsel %vm214, %v220, %v221
        %v223 = vrot.slane %v165, 1
        %v224 = vsel %vm214, %v221, %v223
        %v225 = vrot.slane %v166, 1
        %v226 = vrot.slane %v167, 1
        %v227 = vsel %vm214, %v225, %v226
        %v228 = vrot.slane %v168, 1
        %v229 = vsel %vm214, %v226, %v228
        %v230 = vrot.slane %v169, 1
        %v231 = vrot.slane %v170, 1
        %v232 = vsel %vm214, %v230, %v231
        %v233 = vrot.slane %v171, 1
        %v234 = vsel %vm214, %v231, %v233
        %v235 = vrot.slane %v172, 1
        %v236 = vrot.slane %v173, 1
        %v237 = vsel %vm214, %v235, %v236
        %v238 = vrot.slane %v174, 1
        %v239 = vsel %vm214, %v236, %v238
        %v240 = vrot.slane %v175, 1
        %v241 = vrot.slane %v176, 1
        %v242 = vsel %vm214, %v240, %v241
        %v243 = vrot.slane %v177, 1
        %v244 = vsel %vm214, %v241, %v243
        %v245 = vrot.slane %v178, 1
        %v246 = vrot.slane %v179, 1
        %v247 = vsel %vm214, %v245, %v246
        %v248 = vrot.slane %v180, 1
        %v249 = vsel %vm214, %v246, %v248
        %v250 = vrot.slane %v181, 1
        %v251 = vrot.slane %v182, 1
        %v252 = vsel %vm214, %v250, %v251
        %v253 = vrot.slane %v183, 1
        %v254 = vsel %vm214, %v251, %v253
        %vm255 = vcmask 1045504
        %v256 = vrot.slane %v160, 2
        %v257 = vrot.slane %v161, 2
        %v258 = vsel %vm255, %v256, %v257
        %v259 = vrot.slane %v162, 2
        %v260 = vsel %vm255, %v257, %v259
        %v261 = vrot.slane %v163, 2
        %v262 = vrot.slane %v164, 2
        %v263 = vsel %vm255, %v261, %v262
        %v264 = vrot.slane %v165, 2
        %v265 = vsel %vm255, %v262, %v264
        %v266 = vrot.slane %v166, 2
        %v267 = vrot.slane %v167, 2
        %v268 = vsel %vm255, %v266, %v267
        %v269 = vrot.slane %v168, 2
        %v270 = vsel %vm255, %v267, %v269
        %v271 = vrot.slane %v169, 2
        %v272 = vrot.slane %v170, 2
        %v273 = vsel %vm255, %v271, %v272
        %v274 = vrot.slane %v171, 2
        %v275 = vsel %vm255, %v272, %v274
        %v276 = vrot.slane %v172, 2
        %v277 = vrot.slane %v173, 2
        %v278 = vsel %vm255, %v276, %v277
        %v279 = vrot.slane %v174, 2
        %v280 = vsel %vm255, %v277, %v279
        %v281 = vrot.slane %v175, 2
        %v282 = vrot.slane %v176, 2
        %v283 = vsel %vm255, %v281, %v282
        %v284 = vrot.slane %v177, 2
        %v285 = vsel %vm255, %v282, %v284
        %v286 = vrot.slane %v178, 2
        %v287 = vrot.slane %v179, 2
        %v288 = vsel %vm255, %v286, %v287
        %v289 = vrot.slane %v180, 2
        %v290 = vsel %vm255, %v287, %v289
        %v291 = vrot.slane %v181, 2
        %v292 = vrot.slane %v182, 2
        %v293 = vsel %vm255, %v291, %v292
        %v294 = vrot.slane %v183, 2
        %v295 = vsel %vm255, %v292, %v294
        %v299 = vrot.slane %v184, 1
        %v300 = vrot.slane %v185, 1
        %v301 = vsel %vm214, %v299, %v300
        %v302 = vrot.slane %v186, 1
        %v303 = vsel %vm214, %v300, %v302
        %v304 = vrot.slane %v184, 2
        %v305 = vrot.slane %v185, 2
        %v306 = vsel %vm255, %v304, %v305
        %v307 = vrot.slane %v186, 2
        %v308 = vsel %vm255, %v305, %v307
        %v312 = vrot.slane %v187, 1
        %v313 = vrot.slane %v188, 1
        %v314 = vsel %vm214, %v312, %v313
        %v315 = vrot.slane %v189, 1
        %v316 = vsel %vm214, %v313, %v315
        %v317 = vrot.slane %v187, 2
        %v318 = vrot.slane %v188, 2
        %v319 = vsel %vm255, %v317, %v318
        %v320 = vrot.slane %v189, 2
        %v321 = vsel %vm255, %v318, %v320
        %322 = vrot.lane.b32.xlu0 %v217, 4
        %v323 = vpop.permute.xlu0 %322
        %324 = vrot.lane.b32.xlu0 %v219, 4
        %v325 = vpop.permute.xlu0 %324
        %326 = vrot.lane.b32.xlu0 %v222, 4
        %v327 = vpop.permute.xlu0 %326
        %328 = vrot.lane.b32.xlu0 %v224, 4
        %v329 = vpop.permute.xlu0 %328
        %330 = vrot.lane.b32.xlu0 %v227, 4
        %v331 = vpop.permute.xlu0 %330
        %332 = vrot.lane.b32.xlu0 %v229, 4
        %v333 = vpop.permute.xlu0 %332
        %334 = vrot.lane.b32.xlu0 %v232, 4
        %v335 = vpop.permute.xlu0 %334
        %336 = vrot.lane.b32.xlu0 %v234, 4
        %v337 = vpop.permute.xlu0 %336
        %338 = vrot.lane.b32.xlu0 %v237, 4
        %v339 = vpop.permute.xlu0 %338
        %340 = vrot.lane.b32.xlu0 %v239, 4
        %v341 = vpop.permute.xlu0 %340
        %342 = vrot.lane.b32.xlu0 %v242, 4
        %v343 = vpop.permute.xlu0 %342
        %344 = vrot.lane.b32.xlu0 %v244, 4
        %v345 = vpop.permute.xlu0 %344
        %346 = vrot.lane.b32.xlu0 %v247, 4
        %v347 = vpop.permute.xlu0 %346
        %348 = vrot.lane.b32.xlu0 %v249, 4
        %v349 = vpop.permute.xlu0 %348
        %350 = vrot.lane.b32.xlu0 %v252, 4
        %v351 = vpop.permute.xlu0 %350
        %352 = vrot.lane.b32.xlu0 %v254, 4
        %v353 = vpop.permute.xlu0 %352
        %370 = vrot.lane.b32.xlu0 %v258, 8
        %v371 = vpop.permute.xlu0 %370
        %372 = vrot.lane.b32.xlu0 %v260, 8
        %v373 = vpop.permute.xlu0 %372
        %374 = vrot.lane.b32.xlu0 %v263, 8
        %v375 = vpop.permute.xlu0 %374
        %376 = vrot.lane.b32.xlu0 %v265, 8
        %v377 = vpop.permute.xlu0 %376
        %378 = vrot.lane.b32.xlu0 %v268, 8
        %v379 = vpop.permute.xlu0 %378
        %380 = vrot.lane.b32.xlu0 %v270, 8
        %v381 = vpop.permute.xlu0 %380
        %382 = vrot.lane.b32.xlu0 %v273, 8
        %v383 = vpop.permute.xlu0 %382
        %384 = vrot.lane.b32.xlu0 %v275, 8
        %v385 = vpop.permute.xlu0 %384
        %386 = vrot.lane.b32.xlu0 %v278, 8
        %v387 = vpop.permute.xlu0 %386
        %388 = vrot.lane.b32.xlu0 %v280, 8
        %v389 = vpop.permute.xlu0 %388
        %390 = vrot.lane.b32.xlu0 %v283, 8
        %v391 = vpop.permute.xlu0 %390
        %392 = vrot.lane.b32.xlu0 %v285, 8
        %v393 = vpop.permute.xlu0 %392
        %394 = vrot.lane.b32.xlu0 %v288, 8
        %v395 = vpop.permute.xlu0 %394
        %396 = vrot.lane.b32.xlu0 %v290, 8
        %v397 = vpop.permute.xlu0 %396
        %398 = vrot.lane.b32.xlu0 %v293, 8
        %v399 = vpop.permute.xlu0 %398
        %400 = vrot.lane.b32.xlu0 %v295, 8
        %v401 = vpop.permute.xlu0 %400
        %418 = vrot.lane.b32.xlu0 %v163, 12
        %v419 = vpop.permute.xlu0 %418
        %420 = vrot.lane.b32.xlu0 %v164, 12
        %v421 = vpop.permute.xlu0 %420
        %422 = vrot.lane.b32.xlu0 %v166, 12
        %v423 = vpop.permute.xlu0 %422
        %424 = vrot.lane.b32.xlu0 %v167, 12
        %v425 = vpop.permute.xlu0 %424
        %426 = vrot.lane.b32.xlu0 %v169, 12
        %v427 = vpop.permute.xlu0 %426
        %428 = vrot.lane.b32.xlu0 %v170, 12
        %v429 = vpop.permute.xlu0 %428
        %430 = vrot.lane.b32.xlu0 %v172, 12
        %v431 = vpop.permute.xlu0 %430
        %432 = vrot.lane.b32.xlu0 %v173, 12
        %v433 = vpop.permute.xlu0 %432
        %434 = vrot.lane.b32.xlu0 %v175, 12
        %v435 = vpop.permute.xlu0 %434
        %436 = vrot.lane.b32.xlu0 %v176, 12
        %v437 = vpop.permute.xlu0 %436
        %438 = vrot.lane.b32.xlu0 %v178, 12
        %v439 = vpop.permute.xlu0 %438
        %440 = vrot.lane.b32.xlu0 %v179, 12
        %v441 = vpop.permute.xlu0 %440
        %442 = vrot.lane.b32.xlu0 %v181, 12
        %v443 = vpop.permute.xlu0 %442
        %444 = vrot.lane.b32.xlu0 %v182, 12
        %v445 = vpop.permute.xlu0 %444
        %446 = vrot.lane.b32.xlu0 %v184, 12
        %v447 = vpop.permute.xlu0 %446
        %448 = vrot.lane.b32.xlu0 %v185, 12
        %v449 = vpop.permute.xlu0 %448
        %466 = vrot.lane.b32.xlu0 %v222, 16
        %v467 = vpop.permute.xlu0 %466
        %468 = vrot.lane.b32.xlu0 %v224, 16
        %v469 = vpop.permute.xlu0 %468
        %470 = vrot.lane.b32.xlu0 %v227, 16
        %v471 = vpop.permute.xlu0 %470
        %472 = vrot.lane.b32.xlu0 %v229, 16
        %v473 = vpop.permute.xlu0 %472
        %474 = vrot.lane.b32.xlu0 %v232, 16
        %v475 = vpop.permute.xlu0 %474
        %476 = vrot.lane.b32.xlu0 %v234, 16
        %v477 = vpop.permute.xlu0 %476
        %478 = vrot.lane.b32.xlu0 %v237, 16
        %v479 = vpop.permute.xlu0 %478
        %480 = vrot.lane.b32.xlu0 %v239, 16
        %v481 = vpop.permute.xlu0 %480
        %482 = vrot.lane.b32.xlu0 %v242, 16
        %v483 = vpop.permute.xlu0 %482
        %484 = vrot.lane.b32.xlu0 %v244, 16
        %v485 = vpop.permute.xlu0 %484
        %486 = vrot.lane.b32.xlu0 %v247, 16
        %v487 = vpop.permute.xlu0 %486
        %488 = vrot.lane.b32.xlu0 %v249, 16
        %v489 = vpop.permute.xlu0 %488
        %490 = vrot.lane.b32.xlu0 %v252, 16
        %v491 = vpop.permute.xlu0 %490
        %492 = vrot.lane.b32.xlu0 %v254, 16
        %v493 = vpop.permute.xlu0 %492
        %494 = vrot.lane.b32.xlu0 %v301, 16
        %v495 = vpop.permute.xlu0 %494
        %496 = vrot.lane.b32.xlu0 %v303, 16
        %v497 = vpop.permute.xlu0 %496
        %514 = vrot.lane.b32.xlu0 %v263, 20
        %v515 = vpop.permute.xlu0 %514
        %516 = vrot.lane.b32.xlu0 %v265, 20
        %v517 = vpop.permute.xlu0 %516
        %518 = vrot.lane.b32.xlu0 %v268, 20
        %v519 = vpop.permute.xlu0 %518
        %520 = vrot.lane.b32.xlu0 %v270, 20
        %v521 = vpop.permute.xlu0 %520
        %522 = vrot.lane.b32.xlu0 %v273, 20
        %v523 = vpop.permute.xlu0 %522
        %524 = vrot.lane.b32.xlu0 %v275, 20
        %v525 = vpop.permute.xlu0 %524
        %526 = vrot.lane.b32.xlu0 %v278, 20
        %v527 = vpop.permute.xlu0 %526
        %528 = vrot.lane.b32.xlu0 %v280, 20
        %v529 = vpop.permute.xlu0 %528
        %530 = vrot.lane.b32.xlu0 %v283, 20
        %v531 = vpop.permute.xlu0 %530
        %532 = vrot.lane.b32.xlu0 %v285, 20
        %v533 = vpop.permute.xlu0 %532
        %534 = vrot.lane.b32.xlu0 %v288, 20
        %v535 = vpop.permute.xlu0 %534
        %536 = vrot.lane.b32.xlu0 %v290, 20
        %v537 = vpop.permute.xlu0 %536
        %538 = vrot.lane.b32.xlu0 %v293, 20
        %v539 = vpop.permute.xlu0 %538
        %540 = vrot.lane.b32.xlu0 %v295, 20
        %v541 = vpop.permute.xlu0 %540
        %542 = vrot.lane.b32.xlu0 %v306, 20
        %v543 = vpop.permute.xlu0 %542
        %544 = vrot.lane.b32.xlu0 %v308, 20
        %v545 = vpop.permute.xlu0 %544
        %562 = vrot.lane.b32.xlu0 %v166, 24
        %v563 = vpop.permute.xlu0 %562
        %564 = vrot.lane.b32.xlu0 %v167, 24
        %v565 = vpop.permute.xlu0 %564
        %566 = vrot.lane.b32.xlu0 %v169, 24
        %v567 = vpop.permute.xlu0 %566
        %568 = vrot.lane.b32.xlu0 %v170, 24
        %v569 = vpop.permute.xlu0 %568
        %570 = vrot.lane.b32.xlu0 %v172, 24
        %v571 = vpop.permute.xlu0 %570
        %572 = vrot.lane.b32.xlu0 %v173, 24
        %v573 = vpop.permute.xlu0 %572
        %574 = vrot.lane.b32.xlu0 %v175, 24
        %v575 = vpop.permute.xlu0 %574
        %576 = vrot.lane.b32.xlu0 %v176, 24
        %v577 = vpop.permute.xlu0 %576
        %578 = vrot.lane.b32.xlu0 %v178, 24
        %v579 = vpop.permute.xlu0 %578
        %580 = vrot.lane.b32.xlu0 %v179, 24
        %v581 = vpop.permute.xlu0 %580
        %582 = vrot.lane.b32.xlu0 %v181, 24
        %v583 = vpop.permute.xlu0 %582
        %584 = vrot.lane.b32.xlu0 %v182, 24
        %v585 = vpop.permute.xlu0 %584
        %586 = vrot.lane.b32.xlu0 %v184, 24
        %v587 = vpop.permute.xlu0 %586
        %588 = vrot.lane.b32.xlu0 %v185, 24
        %v589 = vpop.permute.xlu0 %588
        %590 = vrot.lane.b32.xlu0 %v187, 24
        %v591 = vpop.permute.xlu0 %590
        %592 = vrot.lane.b32.xlu0 %v188, 24
        %v593 = vpop.permute.xlu0 %592
        %610 = vrot.lane.b32.xlu0 %v227, 28
        %v611 = vpop.permute.xlu0 %610
        %612 = vrot.lane.b32.xlu0 %v229, 28
        %v613 = vpop.permute.xlu0 %612
        %614 = vrot.lane.b32.xlu0 %v232, 28
        %v615 = vpop.permute.xlu0 %614
        %616 = vrot.lane.b32.xlu0 %v234, 28
        %v617 = vpop.permute.xlu0 %616
        %618 = vrot.lane.b32.xlu0 %v237, 28
        %v619 = vpop.permute.xlu0 %618
        %620 = vrot.lane.b32.xlu0 %v239, 28
        %v621 = vpop.permute.xlu0 %620
        %622 = vrot.lane.b32.xlu0 %v242, 28
        %v623 = vpop.permute.xlu0 %622
        %624 = vrot.lane.b32.xlu0 %v244, 28
        %v625 = vpop.permute.xlu0 %624
        %626 = vrot.lane.b32.xlu0 %v247, 28
        %v627 = vpop.permute.xlu0 %626
        %628 = vrot.lane.b32.xlu0 %v249, 28
        %v629 = vpop.permute.xlu0 %628
        %630 = vrot.lane.b32.xlu0 %v252, 28
        %v631 = vpop.permute.xlu0 %630
        %632 = vrot.lane.b32.xlu0 %v254, 28
        %v633 = vpop.permute.xlu0 %632
        %634 = vrot.lane.b32.xlu0 %v301, 28
        %v635 = vpop.permute.xlu0 %634
        %636 = vrot.lane.b32.xlu0 %v303, 28
        %v637 = vpop.permute.xlu0 %636
        %638 = vrot.lane.b32.xlu0 %v314, 28
        %v639 = vpop.permute.xlu0 %638
        %640 = vrot.lane.b32.xlu0 %v316, 28
        %v641 = vpop.permute.xlu0 %640
        %658 = vrot.lane.b32.xlu0 %v268, 32
        %v659 = vpop.permute.xlu0 %658
        %660 = vrot.lane.b32.xlu0 %v270, 32
        %v661 = vpop.permute.xlu0 %660
        %662 = vrot.lane.b32.xlu0 %v273, 32
        %v663 = vpop.permute.xlu0 %662
        %664 = vrot.lane.b32.xlu0 %v275, 32
        %v665 = vpop.permute.xlu0 %664
        %666 = vrot.lane.b32.xlu0 %v278, 32
        %v667 = vpop.permute.xlu0 %666
        %668 = vrot.lane.b32.xlu0 %v280, 32
        %v669 = vpop.permute.xlu0 %668
        %670 = vrot.lane.b32.xlu0 %v283, 32
        %v671 = vpop.permute.xlu0 %670
        %672 = vrot.lane.b32.xlu0 %v285, 32
        %v673 = vpop.permute.xlu0 %672
        %674 = vrot.lane.b32.xlu0 %v288, 32
        %v675 = vpop.permute.xlu0 %674
        %676 = vrot.lane.b32.xlu0 %v290, 32
        %v677 = vpop.permute.xlu0 %676
        %678 = vrot.lane.b32.xlu0 %v293, 32
        %v679 = vpop.permute.xlu0 %678
        %680 = vrot.lane.b32.xlu0 %v295, 32
        %v681 = vpop.permute.xlu0 %680
        %682 = vrot.lane.b32.xlu0 %v306, 32
        %v683 = vpop.permute.xlu0 %682
        %684 = vrot.lane.b32.xlu0 %v308, 32
        %v685 = vpop.permute.xlu0 %684
        %686 = vrot.lane.b32.xlu0 %v319, 32
        %v687 = vpop.permute.xlu0 %686
        %688 = vrot.lane.b32.xlu0 %v321, 32
        %v689 = vpop.permute.xlu0 %688
        %vm706 = vcmask 31744
        %v707 = vsel %vm706, %v160, %v323
        %v708 = vsel %vm706, %v161, %v325
        %v709 = vsel %vm706, %v163, %v327
        %v710 = vsel %vm706, %v164, %v329
        %v711 = vsel %vm706, %v166, %v331
        %v712 = vsel %vm706, %v167, %v333
        %v713 = vsel %vm706, %v169, %v335
        %v714 = vsel %vm706, %v170, %v337
        %v715 = vsel %vm706, %v172, %v339
        %v716 = vsel %vm706, %v173, %v341
        %v717 = vsel %vm706, %v175, %v343
        %v718 = vsel %vm706, %v176, %v345
        %v719 = vsel %vm706, %v178, %v347
        %v720 = vsel %vm706, %v179, %v349
        %v721 = vsel %vm706, %v181, %v351
        %v722 = vsel %vm706, %v182, %v353
        %vm723 = vcmask 64512
        %v724 = vsel %vm723, %v707, %v371
        %v725 = vsel %vm723, %v708, %v373
        %v726 = vsel %vm723, %v709, %v375
        %v727 = vsel %vm723, %v710, %v377
        %v728 = vsel %vm723, %v711, %v379
        %v729 = vsel %vm723, %v712, %v381
        %v730 = vsel %vm723, %v713, %v383
        %v731 = vsel %vm723, %v714, %v385
        %v732 = vsel %vm723, %v715, %v387
        %v733 = vsel %vm723, %v716, %v389
        %v734 = vsel %vm723, %v717, %v391
        %v735 = vsel %vm723, %v718, %v393
        %v736 = vsel %vm723, %v719, %v395
        %v737 = vsel %vm723, %v720, %v397
        %v738 = vsel %vm723, %v721, %v399
        %v739 = vsel %vm723, %v722, %v401
        %vm740 = vcmask 97280
        %v741 = vsel %vm740, %v724, %v419
        %v742 = vsel %vm740, %v725, %v421
        %v743 = vsel %vm740, %v726, %v423
        %v744 = vsel %vm740, %v727, %v425
        %v745 = vsel %vm740, %v728, %v427
        %v746 = vsel %vm740, %v729, %v429
        %v747 = vsel %vm740, %v730, %v431
        %v748 = vsel %vm740, %v731, %v433
        %v749 = vsel %vm740, %v732, %v435
        %v750 = vsel %vm740, %v733, %v437
        %v751 = vsel %vm740, %v734, %v439
        %v752 = vsel %vm740, %v735, %v441
        %v753 = vsel %vm740, %v736, %v443
        %v754 = vsel %vm740, %v737, %v445
        %v755 = vsel %vm740, %v738, %v447
        %v756 = vsel %vm740, %v739, %v449
        %vm757 = vcmask 130048
        %v758 = vsel %vm757, %v741, %v467
        %v759 = vsel %vm757, %v742, %v469
        %v760 = vsel %vm757, %v743, %v471
        %v761 = vsel %vm757, %v744, %v473
        %v762 = vsel %vm757, %v745, %v475
        %v763 = vsel %vm757, %v746, %v477
        %v764 = vsel %vm757, %v747, %v479
        %v765 = vsel %vm757, %v748, %v481
        %v766 = vsel %vm757, %v749, %v483
        %v767 = vsel %vm757, %v750, %v485
        %v768 = vsel %vm757, %v751, %v487
        %v769 = vsel %vm757, %v752, %v489
        %v770 = vsel %vm757, %v753, %v491
        %v771 = vsel %vm757, %v754, %v493
        %v772 = vsel %vm757, %v755, %v495
        %v773 = vsel %vm757, %v756, %v497
        %vm774 = vcmask 162816
        %v775 = vsel %vm774, %v758, %v515
        %v776 = vsel %vm774, %v759, %v517
        %v777 = vsel %vm774, %v760, %v519
        %v778 = vsel %vm774, %v761, %v521
        %v779 = vsel %vm774, %v762, %v523
        %v780 = vsel %vm774, %v763, %v525
        %v781 = vsel %vm774, %v764, %v527
        %v782 = vsel %vm774, %v765, %v529
        %v783 = vsel %vm774, %v766, %v531
        %v784 = vsel %vm774, %v767, %v533
        %v785 = vsel %vm774, %v768, %v535
        %v786 = vsel %vm774, %v769, %v537
        %v787 = vsel %vm774, %v770, %v539
        %v788 = vsel %vm774, %v771, %v541
        %v789 = vsel %vm774, %v772, %v543
        %v790 = vsel %vm774, %v773, %v545
        %vm791 = vcmask 195584
        %v792 = vsel %vm791, %v775, %v563
        %v793 = vsel %vm791, %v776, %v565
        %v794 = vsel %vm791, %v777, %v567
        %v795 = vsel %vm791, %v778, %v569
        %v796 = vsel %vm791, %v779, %v571
        %v797 = vsel %vm791, %v780, %v573
        %v798 = vsel %vm791, %v781, %v575
        %v799 = vsel %vm791, %v782, %v577
        %v800 = vsel %vm791, %v783, %v579
        %v801 = vsel %vm791, %v784, %v581
        %v802 = vsel %vm791, %v785, %v583
        %v803 = vsel %vm791, %v786, %v585
        %v804 = vsel %vm791, %v787, %v587
        %v805 = vsel %vm791, %v788, %v589
        %v806 = vsel %vm791, %v789, %v591
        %v807 = vsel %vm791, %v790, %v593
        %vm808 = vcmask 228352
        %v809 = vsel %vm808, %v792, %v611
        %v810 = vsel %vm808, %v793, %v613
        %v811 = vsel %vm808, %v794, %v615
        %v812 = vsel %vm808, %v795, %v617
        %v813 = vsel %vm808, %v796, %v619
        %v814 = vsel %vm808, %v797, %v621
        %v815 = vsel %vm808, %v798, %v623
        %v816 = vsel %vm808, %v799, %v625
        %v817 = vsel %vm808, %v800, %v627
        %v818 = vsel %vm808, %v801, %v629
        %v819 = vsel %vm808, %v802, %v631
        %v820 = vsel %vm808, %v803, %v633
        %v821 = vsel %vm808, %v804, %v635
        %v822 = vsel %vm808, %v805, %v637
        %v823 = vsel %vm808, %v806, %v639
        %v824 = vsel %vm808, %v807, %v641
        %vm825 = vcmask 261120
        %v826 = vsel %vm825, %v809, %v659
        %v827 = vsel %vm825, %v810, %v661
        %v828 = vsel %vm825, %v811, %v663
        %v829 = vsel %vm825, %v812, %v665
        %v830 = vsel %vm825, %v813, %v667
        %v831 = vsel %vm825, %v814, %v669
        %v832 = vsel %vm825, %v815, %v671
        %v833 = vsel %vm825, %v816, %v673
        %v834 = vsel %vm825, %v817, %v675
        %v835 = vsel %vm825, %v818, %v677
        %v836 = vsel %vm825, %v819, %v679
        %v837 = vsel %vm825, %v820, %v681
        %v838 = vsel %vm825, %v821, %v683
        %v839 = vsel %vm825, %v822, %v685
        %v840 = vsel %vm825, %v823, %v687
        %v841 = vsel %vm825, %v824, %v689
        %v842 = vld [vmem:[%s1] sm:$0xff]
        %v843 = vld [vmem:[%s1 + $0x8] sm:$0xff]
        %v844 = vld [vmem:[%s1 + $0x10] sm:$0xff]
        %v845 = vld [vmem:[%s1 + $0x18] sm:$0xff]
        %v846 = vld [vmem:[%s1 + $0x20] sm:$0xf]
        %vm847 = vcmask 293888
        %v849 = vsel %vm847, %v826, 0
        %v852 = vsel %vm847, %v827, 0
        %v855 = vsel %vm847, %v828, 0
        %v858 = vsel %vm847, %v829, 0
        %v861 = vsel %vm847, %v830, 0
        %v864 = vsel %vm847, %v831, 0
        %v867 = vsel %vm847, %v832, 0
        %v870 = vsel %vm847, %v833, 0
        %v873 = vsel %vm847, %v834, 0
        %v876 = vsel %vm847, %v835, 0
        %v879 = vsel %vm847, %v836, 0
        %v882 = vsel %vm847, %v837, 0
        %v885 = vsel %vm847, %v838, 0
        %v888 = vsel %vm847, %v839, 0
        %v891 = vsel %vm847, %v840, 0
        %v894 = vsel %vm847, %v841, 0
        %vm896 = vcmask 1043456
        %v898 = vsel %vm896, %v846, 0
        %900 = vmatpush.msra.mxu0 0.0
        %901 = vmatpush.msra.mxu0 0.0
        %902 = vmatpush.msra.mxu0 0.0
        %903 = vmatpush.msra.mxu0 0.0
        %904 = vmatpush.msra.mxu0 0.0
        %905 = vmatpush.msra.mxu0 0.0
        %906 = vmatpush.msra.mxu0 0.0
        %907 = vmatpush.msra.mxu0 0.0
        %908 = vmatpush.msra.mxu0 0.0
        %909 = vmatpush.msra.mxu0 0.0
        %910 = vmatpush.msra.mxu0 0.0
        %911 = vmatpush.msra.mxu0 %v898
        %912 = vmatpush.msra.mxu0 %v845
        %913 = vmatpush.msra.mxu0 %v844
        %914 = vmatpush.msra.mxu0 %v843
        %915 = vmatpush.msra.mxu0 %v842
        %916 = vmatmul.f32.gmra.mxu0 %v849
        %v917 = vpop.f32.mrf.mxu0
        %v918 = vadd.f32 0.0, %v917
        %919 = vmatmul.f32.gmra.mxu0 %v852
        %v920 = vpop.f32.mrf.mxu0
        %v921 = vadd.f32 0.0, %v920
        %922 = vmatmul.f32.gmra.mxu0 %v855
        %v923 = vpop.f32.mrf.mxu0
        %v924 = vadd.f32 0.0, %v923
        %925 = vmatmul.f32.gmra.mxu0 %v858
        %v926 = vpop.f32.mrf.mxu0
        %v927 = vadd.f32 0.0, %v926
        %928 = vmatmul.f32.gmra.mxu0 %v861
        %v929 = vpop.f32.mrf.mxu0
        %v930 = vadd.f32 0.0, %v929
        %931 = vmatmul.f32.gmra.mxu0 %v864
        %v932 = vpop.f32.mrf.mxu0
        %v933 = vadd.f32 0.0, %v932
        %934 = vmatmul.f32.gmra.mxu0 %v867
        %v935 = vpop.f32.mrf.mxu0
        %v936 = vadd.f32 0.0, %v935
        %937 = vmatmul.f32.gmra.mxu0 %v870
        %v938 = vpop.f32.mrf.mxu0
        %v939 = vadd.f32 0.0, %v938
        %940 = vmatmul.f32.gmra.mxu0 %v873
        %v941 = vpop.f32.mrf.mxu0
        %v942 = vadd.f32 0.0, %v941
        %943 = vmatmul.f32.gmra.mxu0 %v876
        %v944 = vpop.f32.mrf.mxu0
        %v945 = vadd.f32 0.0, %v944
        %946 = vmatmul.f32.gmra.mxu0 %v879
        %v947 = vpop.f32.mrf.mxu0
        %v948 = vadd.f32 0.0, %v947
        %949 = vmatmul.f32.gmra.mxu0 %v882
        %v950 = vpop.f32.mrf.mxu0
        %v951 = vadd.f32 0.0, %v950
        %952 = vmatmul.f32.gmra.mxu0 %v885
        %v953 = vpop.f32.mrf.mxu0
        %v954 = vadd.f32 0.0, %v953
        %955 = vmatmul.f32.gmra.mxu0 %v888
        %v956 = vpop.f32.mrf.mxu0
        %v957 = vadd.f32 0.0, %v956
        %958 = vmatmul.f32.gmra.mxu0 %v891
        %v959 = vpop.f32.mrf.mxu0
        %v960 = vadd.f32 0.0, %v959
        %961 = vmatmul.f32.gmra.mxu0 %v894
        %v962 = vpop.f32.mrf.mxu0
        %v963 = vadd.f32 0.0, %v962
        %964 = vdwg.mxu0
        %965 = vst [vmem:[%s150] sm:$0xff] %v918
        %966 = vst [vmem:[%s150 + $0x8] sm:$0xff] %v921
        %967 = vst [vmem:[%s150 + $0x10] sm:$0xff] %v924
        %968 = vst [vmem:[%s150 + $0x18] sm:$0xff] %v927
        %969 = vst [vmem:[%s150 + $0x20] sm:$0xff] %v930
        %970 = vst [vmem:[%s150 + $0x28] sm:$0xff] %v933
        %971 = vst [vmem:[%s150 + $0x30] sm:$0xff] %v936
        %972 = vst [vmem:[%s150 + $0x38] sm:$0xff] %v939
        %973 = vst [vmem:[%s150 + $0x40] sm:$0xff] %v942
        %974 = vst [vmem:[%s150 + $0x48] sm:$0xff] %v945
        %975 = vst [vmem:[%s150 + $0x50] sm:$0xff] %v948
        %976 = vst [vmem:[%s150 + $0x58] sm:$0xff] %v951
        %977 = vst [vmem:[%s150 + $0x60] sm:$0xff] %v954
        %978 = vst [vmem:[%s150 + $0x68] sm:$0xff] %v957
        %979 = vst [vmem:[%s150 + $0x70] sm:$0xff] %v960
        %980 = vst [vmem:[%s150 + $0x78] sm:$0xff] %v963
        %s981 = sand.u32 %s85, 1
        %s982 = scalar_lea.sflag [#allocation3], %s981
        %s983 = sand.u32 %s85, 1
        %s984 = smul.addr %s983, 128
        %s985 = scalar_lea.vmem [#allocation2], %s984
        // Predicated region
        $region29: #{tpu_custom_call.1} parent=27 // pred_check
          %p986 = pneg %p95
        $region30: #{tpu_custom_call.1} parent=27 // pred_check_branch
          %988 = sbr.rel (%p986) target = $region32
        $region31: #{tpu_custom_call.1} parent=27 // pred_region
          %s989 = smul.u32 8, %s21
          %991 = vsyncadd %s982, 0
          %s992 = smul.addr %s989, 2
          %s993 = smul.addr %s20, 32
          %s994 = sadd.s32 %s992, %s993
          %s995 = smul.addr %s994, 8
          %s996 = scalar_lea.hbm %s2, %s995
          %s997 = sshll.u32 %s985, 4
          %s998 = int_to_ptr.vmem [resolvable:$true] %s997
          %s999 = sshll.u32 %s996, 4
          %s1000 = int_to_ptr.hbm [resolvable:$true] %s999
          %1005 = dma.vmem_to_hbm [thread:$0]  %s998, 2048, %s1000, %s982, 128, 128, 8
        $region32: #{tpu_custom_call.1} parent=27 // pred_fallthru
          _
      $region28: #{tpu_custom_call.1} parent=5 // pred_fallthru
        _
      %p1006 = scmp.le.s32.totalorder 2, %s11
      // Predicated region
      $region33: #{tpu_custom_call.1} parent=5 // pred_check
        %p1007 = pneg %p1006
      $region34: #{tpu_custom_call.1} parent=5 // pred_check_branch
        %1009 = sbr.rel (%p1007) target = $region36
      $region35: #{tpu_custom_call.1} parent=5 // pred_region
        %s1010 = ssub.s32 %s11, 2
        // Predicated region
        $region37: #{tpu_custom_call.1} parent=35 // pred_check
          %p1011 = pneg %p101
        $region38: #{tpu_custom_call.1} parent=35 // pred_check_branch
          %1013 = sbr.rel (%p1011) target = $region40
        $region39: #{tpu_custom_call.1} parent=35 // pred_region
          %s1014 = sand.u32 %s86, 1
          %s1015 = scalar_lea.sflag [#allocation3], %s1014
          %s1016 = sand.u32 %s86, 1
          %s1017 = smul.addr %s1016, 128
          %s1018 = scalar_lea.vmem [#allocation2], %s1017
          %1020 = dma.done %s1015, 2048
        $region40: #{tpu_custom_call.1} parent=35 // pred_fallthru
          _
      $region36: #{tpu_custom_call.1} parent=5 // pred_fallthru
        _
    $region6: #{tpu_custom_call.1} parent=1 // loop_footer
      %s15 = sadd.s32 1, %s11
    $region7: #{tpu_custom_call.1} parent=1 // loop_footer_branch
      %10 = sbr.rel target = $region3
    $region8: #{tpu_custom_call.1} parent=1 // loop_exit
      _
    %1021 = vsyncpa [#allocation3], 1
    %s1022 = scalar_lea.sflag [#allocation3], 1
    %1023 = vsyncpa %s1022, 1

</llo_original>
